<compile_context>
chip_gen: v6e
topology: v6e:2x2x1
jax: 0.10.0
libtpu: 0.0.40
codegen_flags: <defaults>
</compile_context>

<pallas_src>
import math

import jax
import jax.numpy as jnp
import numpy as np
from jax.experimental import pallas as pl
from jax.experimental.pallas import tpu as pltpu  # noqa: F401  (TPU backend)


# --------------------------------- kernel ------------------------------------

def _make_kernel(half_dim: int, neg_scale: float):
    """Returns kernel(x_ref, out_ref) computing the sinusoidal embedding.

    x_ref:   (B, 1)      float32   timesteps
    out_ref: (B, 2*half) float32   [sin(x*f) | cos(x*f)]
    """

    def kernel(x_ref, out_ref):
        x = x_ref[...]                                              # (B, 1)

        # frequency row built in-register: exp(k * -log(10000)/(half-1))
        k = jax.lax.broadcasted_iota(jnp.int32, (1, half_dim), 1)
        freqs = jnp.exp(k.astype(jnp.float32) * neg_scale)          # (1, half)

        arg = x * freqs                                             # (B, half)

        # single lane-dense store of the concatenated [sin | cos] block
        out_ref[...] = jnp.concatenate(
            [jnp.sin(arg), jnp.cos(arg)], axis=-1
        ).astype(out_ref.dtype)

    return kernel


# -------------------------------- wrapper ------------------------------------

def sin_pos_embedding_pallas(x, dim: int):
    """x: (B,) timesteps (any float/int dtype). Returns (B, dim) float32."""
    B = x.shape[0]
    half = dim // 2
    neg_scale = -(math.log(10000.0) / (half - 1))

    x2 = x.reshape(B, 1).astype(jnp.float32)

    return pl.pallas_call(
        _make_kernel(half, neg_scale),
        out_shape=jax.ShapeDtypeStruct((B, dim), jnp.float32),
        grid=(1,),                                   # whole batch in one step
        in_specs=[pl.BlockSpec((B, 1), lambda i: (0, 0))],
        out_specs=pl.BlockSpec((B, dim), lambda i: (0, 0)),
    )(x2)


# ----------------------------- pure-JAX reference ----------------------------

def ref_forward(x, dim: int):
    half = dim // 2
    scale = math.log(10000.0) / (half - 1)
    freqs = jnp.exp(jnp.arange(half, dtype=jnp.float32) * -scale)
    arg = x.astype(jnp.float32)[:, None] * freqs[None, :]
    return jnp.concatenate([jnp.sin(arg), jnp.cos(arg)], axis=-1)


# ----------------------------------- main -------------------------------------

if __name__ == "__main__":
    B, DIM = 8, 128                     # dim=128 -> exactly lane-dense output

    key = jax.random.PRNGKey(0)
    # timesteps, e.g. diffusion steps in [0, 100)
    x = jax.random.uniform(key, (B,), jnp.float32, minval=0.0, maxval=100.0)

    out = jax.block_until_ready(sin_pos_embedding_pallas(x, DIM))
    ref = jax.block_until_ready(ref_forward(x, DIM))

    assert out.shape == ref.shape == (B, DIM)
    np.testing.assert_allclose(np.asarray(out), np.asarray(ref),
                               atol=1e-4, rtol=1e-4)
    print("KERNEL_OK")
</pallas_src>

<mosaic_0001>
module attributes {stable_mosaic.version = 11 : i64} {
  func.func @kernel(%arg0: i32, %arg1: memref<8x1xf32, #tpu.memory_space<vmem>>, %arg2: memref<8x128xf32, #tpu.memory_space<vmem>>) attributes {dimension_semantics = [#tpu.dimension_semantics<arbitrary>], iteration_bounds = array<i64: 1>, scalar_prefetch = 0 : i64, scratch_operands = 0 : i64, tpu.core_type = #tpu.core_type<tc>, window_params = [{pipeline_mode = #tpu.pipeline_mode<synchronous>, transform_indices = @transform_0, window_bounds = array<i64: 8, 1>}, {pipeline_mode = #tpu.pipeline_mode<synchronous>, transform_indices = @transform_1, window_bounds = array<i64: 8, 128>}]} {
    %c0 = arith.constant 0 : index
    %c0_0 = arith.constant 0 : index
    %0 = vector.load %arg1[%c0, %c0_0] : memref<8x1xf32, #tpu.memory_space<vmem>>, vector<8x1xf32>
    %1 = tpu.iota {dimensions = array<i32: 1>} : vector<1x64xi32>
    %2 = arith.sitofp %1 : vector<1x64xi32> to vector<1x64xf32>
    %cst = arith.constant -0.146195874 : f32
    %3 = vector.broadcast %cst : f32 to vector<1x64xf32>
    %4 = arith.mulf %2, %3 : vector<1x64xf32>
    %5 = math.exp %4 : vector<1x64xf32>
    %6 = vector.broadcast %0 : vector<8x1xf32> to vector<8x64xf32>
    %7 = vector.broadcast %5 : vector<1x64xf32> to vector<8x64xf32>
    %8 = arith.mulf %6, %7 : vector<8x64xf32>
    %9 = math.sin %8 : vector<8x64xf32>
    %10 = math.cos %8 : vector<8x64xf32>
    %11 = tpu.concatenate %9, %10 in 1 : vector<8x64xf32>, vector<8x64xf32> -> vector<8x128xf32>
    %c0_1 = arith.constant 0 : index
    %c0_2 = arith.constant 0 : index
    %12 = vector.load %arg2[%c0_1, %c0_2] : memref<8x128xf32, #tpu.memory_space<vmem>>, vector<8x128xf32>
    tpu.vector_store %arg2[%c0_1, %c0_2], %11 {strides = array<i32>} : memref<8x128xf32, #tpu.memory_space<vmem>>, vector<8x128xf32>,
    return
  }
  func.func @transform_0(%arg0: i32) -> (i32, i32) {
    %c0_i32 = arith.constant 0 : i32
    %c0_i32_0 = arith.constant 0 : i32
    %c0_i32_1 = arith.constant 0 : i32
    return %c0_i32, %c0_i32_0 : i32, i32
  }
  func.func @transform_1(%arg0: i32) -> (i32, i32) {
    %c0_i32 = arith.constant 0 : i32
    %c0_i32_0 = arith.constant 0 : i32
    %c0_i32_1 = arith.constant 0 : i32
    return %c0_i32, %c0_i32_0 : i32, i32
  }
}

</mosaic_0001>

<llo_original>
// kernel: tpu_custom_call.1
$region0: #{tpu_custom_call.1}
  #allocation0 [shape = 'u32[]', space=smem, size = 0x4, offset = 0x4, fixed_abs, tag = 'smem constant byte address 0x4 - core index']
  #allocation1 [shape = 'u32[144,128]{1,0:T(1,128)}', space=vmem, size = 0x12000, scoped, tag = 'internal scratch']
  %s0 = inlined_call_operand.vmem [shape: f32[8,1], index: 0, kind: input, shape index: {}]
  %s1 = inlined_call_operand.hbm [shape: f32[8,128], index: 1, kind: output, shape index: {}]
  %s2 = sld [smem:[#allocation0]]
  $region14: #{tpu_custom_call.1} parent=0
    _
  %s4 = ssub.s32 1, %s2
  %s5 = scalar_select 0, %s4, %s2
  $region1: #{tpu_custom_call.1} parent=0
    #allocation2 [shape = 'u8[4096]{0}', space=vmem, size = 0x1000, scoped, tag = 'output window, operand 0, single buffered']
    #allocation3 [shape = 's32[1]{0}', space=sflag, size = 0x4, scoped, tag = 'scoped memory for tpu_custom_call.1']
    %6 = vsyncpa [#allocation3], 0
    // Predicated region
    $region2: #{tpu_custom_call.1} parent=1 // pred_check
      _
    $region3: #{tpu_custom_call.1} parent=1 // pred_check_branch
      %8 = sbr.rel (0) target = $region5
    $region4: #{tpu_custom_call.1} parent=1 // pred_region
      _
    $region5: #{tpu_custom_call.1} parent=1 // pred_fallthru
      _
    %v9 = vld [vmem:[%s0] sm:$0xff]
    %v10 = vlaneseq
    %v11 = vand.u32 %v10, 127
    %v12 = vcvt.s32.f32 %v11
    %v13 = vmul.f32 %v12, -0.14619587
    %v14 = vmul.f32 %v13, 1.442695
    %v15 = vpow.pop %v14
    %17 = vset.pattern.permute.xlu0 0
    %18 = vperm.xlu0 %17, %v9
    %v19 = vpop.permute.xlu0 %18
    %v21 = vmul.f32 %v19, %v15
    %v22 = vand.u32 2147483647, %v21
    %vm23 = vcmp.le.f32.partialorder %v22, 0.7853982
    %vm24 = vcmp.lt.s32.totalorder %v21, 0
    %v25 = vand.u32 %v21, 2139095040
    %v26 = vshrl.u32 %v25, 23
    %v27 = vsub.s32 %v26, 127
    %v28 = vand.u32 2147483647, %v21
    %v29 = vand.u32 %v28, 8388607
    %v30 = vor.u32 %v29, 8388608
    %v31 = vsub.s32 0, %v30
    %v32 = vadd.s32 %v27, 1
    %vm33 = vcmp.gt.s32.totalorder %v32, 0
    %v34 = vsel %vm33, %v32, 0
    %v35 = vshrl.u32 %v34, 5
    %v36 = vand.u32 %v34, 31
    %v37 = vsub.s32 32, %v36
    %v38 = vshrl.u32 683565275, %v37
    %v39 = vshll.u32 683565275, %v36
    %v40 = vshrl.u32 2475754826, %v37
    %v41 = vor.u32 %v39, %v40
    %v42 = vshll.u32 2475754826, %v36
    %v43 = vshrl.u32 2131351028, %v37
    %v44 = vor.u32 %v42, %v43
    %v45 = vshll.u32 2131351028, %v36
    %v46 = vshrl.u32 2102212464, %v37
    %v47 = vor.u32 %v45, %v46
    %v48 = vshll.u32 2102212464, %v36
    %v49 = vshrl.u32 920167782, %v37
    %v50 = vor.u32 %v48, %v49
    %v51 = vshll.u32 920167782, %v36
    %v52 = vshrl.u32 1326507024, %v37
    %v53 = vor.u32 %v51, %v52
    %vm54 = vcmp.lt.s32.totalorder %v35, 1
    %vm55 = vcmp.lt.s32.totalorder %v35, 2
    %vm56 = vcmp.lt.s32.totalorder %v35, 3
    %vm57 = vcmp.lt.s32.totalorder %v35, 4
    %v58 = vsel %vm54, %v38, %v41
    %v59 = vsel %vm57, %v47, 2102212464
    %v60 = vsel %vm56, %v44, %v59
    %v61 = vsel %vm55, %v58, %v60
    %v62 = vsel %vm54, %v41, %v44
    %v63 = vsel %vm57, %v50, 920167782
    %v64 = vsel %vm56, %v47, %v63
    %v65 = vsel %vm55, %v62, %v64
    %v66 = vsel %vm54, %v44, %v47
    %v67 = vsel %vm57, %v53, 1326507024
    %v68 = vsel %vm56, %v50, %v67
    %v69 = vsel %vm55, %v66, %v68
    %v70 = vshll.u32 %v30, 8
    %v71 = vmul.u32.u64.compose %v70, %v69
    %v72 = vextract.low.u32 %v71
    %v73 = vextract.high.u32 %v71
    %v74 = vmul.u32.u64.compose %v70, %v65
    %v75 = vextract.low.u32 %v74
    %v76 = vextract.high.u32 %v74
    %v77 = vmul.u32 %v70, %v61
    %v78 = vadd.s32 %v73, %v75
    %vm79 = vc.u32 %v73, %v75
    %v80 = vadd.s32 %v76, 1
    %v81 = vsel %vm79, %v80, %v76
    %v82 = vadd.s32 %v77, %v81
    %v83 = vadd.s32 %v82, 536870912
    %v84 = vshrl.u32 %v83, 30
    %v85 = vshll.u32 %v84, 30
    %v86 = vsub.s32 %v82, %v85
    %vm87 = vcmp.lt.s32.totalorder %v86, 0
    %v88 = vsub.s32 0, %v86
    %v89 = vsel %vm87, %v88, %v86
    %v90 = vclz %v89
    %v91 = vsub.s32 %v90, 2
    %vm92 = vcmp.gt.s32.totalorder 0, %v91
    %v93 = vsel %vm92, 0, %v91
    %v94 = vsub.s32 32, %v93
    %v95 = vshll.u32 %v86, %v93
    %v96 = vshrl.u32 %v78, %v94
    %v97 = vor.u32 %v95, %v96
    %v98 = vsub.s32 4294967266, %v93
    %v99 = vadd.s32 %v98, 127
    %v100 = vshll.u32 %v99, 23
    %v101 = vor.u32 4788187, %v100
    %v102 = vand.u32 2147483647, %v101
    %v104 = vcvt.s32.f32 %v97
    %v105 = vmul.f32 %v104, %v102
    %v106 = vxor.u32 %v105, 2147483648
    %v107 = vsel %vm24, %v106, %v105
    %v108 = vsub.s32 4, %v84
    %v109 = vsel %vm24, %v108, %v84
    %v110 = vsel %vm23, %v21, %v107
    %v111 = vsel %vm23, 0, %v109
    %v112 = vcosq.f32.pop %v110
    %v113 = vsinq.f32.pop %v110
    %vm114 = vweird.f32 %v21
    %v115 = vadd.s32 %v111, 3
    %v116 = vand.u32 %v115, 3
    %vm117 = vcmp.lt.s32.totalorder %v116, 2
    %vm118 = vcmp.eq.s32.totalorder %v116, 0
    %v119 = vxor.u32 %v113, 2147483648
    %v120 = vsel %vm118, %v112, %v119
    %vm121 = vcmp.eq.s32.totalorder %v116, 2
    %v122 = vxor.u32 %v112, 2147483648
    %v123 = vsel %vm121, %v122, %v113
    %v124 = vsel %vm117, %v120, %v123
    %v125 = vsel %vm114, nan, %v124
    %v126 = vand.u32 2147483647, %v21
    %vm127 = vcmp.le.f32.partialorder %v126, 0.7853982
    %vm128 = vcmp.lt.s32.totalorder %v21, 0
    %v129 = vand.u32 %v21, 2139095040
    %v130 = vshrl.u32 %v129, 23
    %v131 = vsub.s32 %v130, 127
    %v132 = vand.u32 2147483647, %v21
    %v133 = vand.u32 %v132, 8388607
    %v134 = vor.u32 %v133, 8388608
    %v135 = vsub.s32 0, %v134
    %v136 = vadd.s32 %v131, 1
    %vm137 = vcmp.gt.s32.totalorder %v136, 0
    %v138 = vsel %vm137, %v136, 0
    %v139 = vshrl.u32 %v138, 5
    %v140 = vand.u32 %v138, 31
    %v141 = vsub.s32 32, %v140
    %v142 = vshrl.u32 683565275, %v141
    %v143 = vshll.u32 683565275, %v140
    %v144 = vshrl.u32 2475754826, %v141
    %v145 = vor.u32 %v143, %v144
    %v146 = vshll.u32 2475754826, %v140
    %v147 = vshrl.u32 2131351028, %v141
    %v148 = vor.u32 %v146, %v147
    %v149 = vshll.u32 2131351028, %v140
    %v150 = vshrl.u32 2102212464, %v141
    %v151 = vor.u32 %v149, %v150
    %v152 = vshll.u32 2102212464, %v140
    %v153 = vshrl.u32 920167782, %v141
    %v154 = vor.u32 %v152, %v153
    %v155 = vshll.u32 920167782, %v140
    %v156 = vshrl.u32 1326507024, %v141
    %v157 = vor.u32 %v155, %v156
    %vm158 = vcmp.lt.s32.totalorder %v139, 1
    %vm159 = vcmp.lt.s32.totalorder %v139, 2
    %vm160 = vcmp.lt.s32.totalorder %v139, 3
    %vm161 = vcmp.lt.s32.totalorder %v139, 4
    %v162 = vsel %vm158, %v142, %v145
    %v163 = vsel %vm161, %v151, 2102212464
    %v164 = vsel %vm160, %v148, %v163
    %v165 = vsel %vm159, %v162, %v164
    %v166 = vsel %vm158, %v145, %v148
    %v167 = vsel %vm161, %v154, 920167782
    %v168 = vsel %vm160, %v151, %v167
    %v169 = vsel %vm159, %v166, %v168
    %v170 = vsel %vm158, %v148, %v151
    %v171 = vsel %vm161, %v157, 1326507024
    %v172 = vsel %vm160, %v154, %v171
    %v173 = vsel %vm159, %v170, %v172
    %v174 = vshll.u32 %v134, 8
    %v175 = vmul.u32.u64.compose %v174, %v173
    %v176 = vextract.low.u32 %v175
    %v177 = vextract.high.u32 %v175
    %v178 = vmul.u32.u64.compose %v174, %v169
    %v179 = vextract.low.u32 %v178
    %v180 = vextract.high.u32 %v178
    %v181 = vmul.u32 %v174, %v165
    %v182 = vadd.s32 %v177, %v179
    %vm183 = vc.u32 %v177, %v179
    %v184 = vadd.s32 %v180, 1
    %v185 = vsel %vm183, %v184, %v180
    %v186 = vadd.s32 %v181, %v185
    %v187 = vadd.s32 %v186, 536870912
    %v188 = vshrl.u32 %v187, 30
    %v189 = vshll.u32 %v188, 30
    %v190 = vsub.s32 %v186, %v189
    %vm191 = vcmp.lt.s32.totalorder %v190, 0
    %v192 = vsub.s32 0, %v190
    %v193 = vsel %vm191, %v192, %v190
    %v194 = vclz %v193
    %v195 = vsub.s32 %v194, 2
    %vm196 = vcmp.gt.s32.totalorder 0, %v195
    %v197 = vsel %vm196, 0, %v195
    %v198 = vsub.s32 32, %v197
    %v199 = vshll.u32 %v190, %v197
    %v200 = vshrl.u32 %v182, %v198
    %v201 = vor.u32 %v199, %v200
    %v202 = vsub.s32 4294967266, %v197
    %v203 = vadd.s32 %v202, 127
    %v204 = vshll.u32 %v203, 23
    %v205 = vor.u32 4788187, %v204
    %v206 = vand.u32 2147483647, %v205
    %v208 = vcvt.s32.f32 %v201
    %v209 = vmul.f32 %v208, %v206
    %v210 = vxor.u32 %v209, 2147483648
    %v211 = vsel %vm128, %v210, %v209
    %v212 = vsub.s32 4, %v188
    %v213 = vsel %vm128, %v212, %v188
    %v214 = vsel %vm127, %v21, %v211
    %v215 = vsel %vm127, 0, %v213
    %v216 = vcosq.f32.pop %v214
    %v217 = vsinq.f32.pop %v214
    %vm218 = vweird.f32 %v21
    %v219 = vand.u32 %v215, 3
    %vm220 = vcmp.lt.s32.totalorder %v219, 2
    %vm221 = vcmp.eq.s32.totalorder %v219, 0
    %v222 = vxor.u32 %v217, 2147483648
    %v223 = vsel %vm221, %v216, %v222
    %vm224 = vcmp.eq.s32.totalorder %v219, 2
    %v225 = vxor.u32 %v216, 2147483648
    %v226 = vsel %vm224, %v225, %v217
    %v227 = vsel %vm220, %v223, %v226
    %v228 = vsel %vm218, nan, %v227
    %230 = vrot.lane.b32.xlu0 %v228, 64
    %v231 = vpop.permute.xlu0 %230
    %vm233 = vcmask 523264
    %v234 = vsel %vm233, %v125, %v231
    %235 = vst [vmem:[#allocation2] sm:$0xff] %v234
    // Predicated region
    $region6: #{tpu_custom_call.1} parent=1 // pred_check
      _
    $region7: #{tpu_custom_call.1} parent=1 // pred_check_branch
      %237 = sbr.rel (0) target = $region9
    $region8: #{tpu_custom_call.1} parent=1 // pred_region
      %s239 = ssub.s32 128, 128
      %240 = vsyncadd [#allocation3], %s239
      %s242 = sshll.u32 [#allocation2], 4
      %s243 = int_to_ptr.vmem [resolvable:$true] %s242
      %245 = dma.vmem_to_hbm [thread:$0]  %s243, 128, %s1, [#allocation3]
    $region9: #{tpu_custom_call.1} parent=1 // pred_fallthru
      _
    // Predicated region
    $region10: #{tpu_custom_call.1} parent=1 // pred_check
      _
    $region11: #{tpu_custom_call.1} parent=1 // pred_check_branch
      %247 = sbr.rel (0) target = $region13
    $region12: #{tpu_custom_call.1} parent=1 // pred_region
      %248 = dma.done [#allocation3], 128
    $region13: #{tpu_custom_call.1} parent=1 // pred_fallthru
      _
    %249 = vsyncpa [#allocation3], 1

</llo_original>
